<compile_context>
chip_gen: v7x
topology: tpu7x:2x2x1
jax: 0.10.0
libtpu: 0.0.40
codegen_flags: <defaults>
</compile_context>

<pallas_src>
import functools
import math

import jax
import jax.numpy as jnp
from jax.experimental import pallas as pl
from jax.experimental.pallas import tpu as pltpu

IGNORE_LABEL = 255
THRESH = 0.6
NUM_CLASSES = 19
# Class-balance weights from the module __init__ (use_weight=True).
CLASS_WEIGHTS = [0.8373, 0.918, 0.866, 1.0345, 1.0166, 0.9969, 0.9754, 1.0489,
                 0.8786, 1.0023, 0.9539, 0.9843, 1.1116, 0.9037, 1.0865, 1.0955,
                 1.0865, 1.1529, 1.0507]


def _ohem_ce_kernel(logits_ref, labels_ref, weights_ref,
                    out_wnll_ref, out_w_ref, *,
                    ignore_label, neg_log_thresh, hw, tile_hw,
                    tiles_per_split, needs_tail_mask):
    # logits_ref : (1, C, T)  labels_ref : (1, 1, T) int  weights_ref : (1, C, 1) f32
    # out_*_ref  : (1, 1, T) f32 accumulators, resident across the pixel-tile ("arbitrary")
    #              axis; one accumulator block per (batch, split) pair.
    @pl.when(pl.program_id(2) == 0)
    def _():
        out_wnll_ref[...] = jnp.zeros_like(out_wnll_ref)
        out_w_ref[...] = jnp.zeros_like(out_w_ref)

    x = logits_ref[...].astype(jnp.float32)                       # (1, C, T)
    lbl = labels_ref[...].astype(jnp.int32)                       # (1, 1, T)
    w = weights_ref[...]                                          # (1, C, 1)

    # log-softmax pieces over the class (sublane) axis
    x_max = jnp.max(x, axis=1, keepdims=True)                     # (1, 1, T)
    ex = jnp.exp(x - x_max)                                       # (1, C, T)
    log_sumexp = jnp.log(jnp.sum(ex, axis=1, keepdims=True))      # (1, 1, T)

    # True-class logit / class weight via boolean mask + selects (no dynamic gather on
    # TPU).  Iota is (1, C, 1); the == broadcasts against the (1, 1, T) labels.
    class_ids = jax.lax.broadcasted_iota(jnp.int32, (1, x.shape[1], 1), 1)
    is_true = class_ids == lbl                                    # (1, C, T) bool; all-False if ignored
    logit_at = jnp.sum(jnp.where(is_true, x, 0.0), axis=1, keepdims=True)   # (1, 1, T)
    w_at = jnp.sum(jnp.where(is_true, w, 0.0), axis=1, keepdims=True)       # (1, 1, T)

    nll = x_max + log_sumexp - logit_at                           # (1, 1, T)

    # OHEM keep test: valid label and prob <= thresh  <=>  nll >= -log(thresh)
    kept = jnp.logical_and(lbl != ignore_label, nll >= neg_log_thresh)
    if needs_tail_mask:
        lane = jax.lax.broadcasted_iota(jnp.int32, lbl.shape, 2)  # (1, 1, T)
        tile_idx = pl.program_id(1) * tiles_per_split + pl.program_id(2)
        kept = jnp.logical_and(kept, tile_idx * tile_hw + lane < hw)

    # lane-dense accumulation (selects, not multiplies, so garbage in masked-off
    # out-of-bounds lanes can never poison the sums)
    out_wnll_ref[...] += jnp.where(kept, w_at * nll, 0.0)
    out_w_ref[...] += jnp.where(kept, w_at, 0.0)


def ohem_cross_entropy_2d(predict, target, *, ignore_label=IGNORE_LABEL,
                          thresh=THRESH, min_kept=0, class_weights=None,
                          tile_hw=16384, vmem_limit_bytes=32 * 1024 * 1024):
    """Equivalent of OhemCrossEntropy2d.forward (min_kept == 0 path).

    predict: (n, c, h, w) float (f32 or bf16 -- bf16 halves the dominant HBM stream,
             recommended on v5e).  target: (n, h, w) integer labels.
    tile_hw: pixels per grid step (multiple of 128).  16384 keeps VMEM use ~10-12 MiB,
             safe on every generation; sweep 8192-32768 for the last few percent.
    """
    n, c, h, w = predict.shape
    assert target.shape == (n, h, w)
    assert tile_hw % 128 == 0

    # TODO(synk): min_kept > 0 needs a global sort/top-k over kept-pixel probabilities
    # to derive a dynamic threshold; only the default min_kept=0 path is implemented.
    assert min_kept == 0, "min_kept > 0 path not implemented"

    hw = h * w
    logits = predict.reshape(n, c, hw)      # free view of contiguous NCHW, no transpose
    labels = target.reshape(n, 1, hw)       # dtype kept as-is; cast to i32 in-kernel

    if hw <= tile_hw:
        t = hw                              # single full-extent block per image
        n_tiles = 1
    else:
        t = tile_hw
        n_tiles = (hw + t - 1) // t
    needs_tail_mask = (hw % t) != 0

    # v7x two-TensorCore balance: when the batch axis alone can't feed both cores,
    # split the pixel-tile axis into a second "parallel" axis.  Only when the tile
    # count divides evenly, so no fully out-of-bounds blocks are ever generated.
    if n == 1 and n_tiles >= 2 and n_tiles % 2 == 0:
        n_split = 2
    else:
        n_split = 1
    tiles_per_split = n_tiles // n_split

    if class_weights is None:
        weights = jnp.ones((1, c, 1), jnp.float32)
    else:
        weights = jnp.asarray(class_weights, jnp.float32).reshape(1, c, 1)

    kernel = functools.partial(
        _ohem_ce_kernel,
        ignore_label=ignore_label,
        neg_log_thresh=float(-math.log(thresh)),
        hw=hw, tile_hw=t,
        tiles_per_split=tiles_per_split,
        needs_tail_mask=needs_tail_mask)

    part_wnll, part_w = pl.pallas_call(
        kernel,
        out_shape=(jax.ShapeDtypeStruct((n * n_split, 1, t), jnp.float32),
                   jax.ShapeDtypeStruct((n * n_split, 1, t), jnp.float32)),
        grid_spec=pltpu.PrefetchScalarGridSpec(
            num_scalar_prefetch=0,
            grid=(n, n_split, tiles_per_split),
            in_specs=[
                pl.BlockSpec((1, c, t),
                             lambda b, s, j: (b, 0, s * tiles_per_split + j)),  # logits
                pl.BlockSpec((1, 1, t),
                             lambda b, s, j: (b, 0, s * tiles_per_split + j)),  # labels
                pl.BlockSpec((1, c, 1), lambda b, s, j: (0, 0, 0)),             # class weights
            ],
            out_specs=(pl.BlockSpec((1, 1, t), lambda b, s, j: (b * n_split + s, 0, 0)),
                       pl.BlockSpec((1, 1, t), lambda b, s, j: (b * n_split + s, 0, 0))),
        ),
        compiler_params=pltpu.CompilerParams(
            dimension_semantics=("parallel", "parallel", "arbitrary"),
            vmem_limit_bytes=vmem_limit_bytes),
    )(logits, labels, weights)

    # Final cross-lane reduce + 'mean' division in JAX glue.
    # (NaN if nothing is kept, matching the PyTorch reference behavior.)
    return jnp.sum(part_wnll) / jnp.sum(part_w)


def _reference_ohem(predict, target, weights, ignore_label, thresh):
    """Pure-JAX reference mirroring the PyTorch forward (min_kept=0)."""
    n, c, h, w = predict.shape
    logits = jnp.transpose(predict, (0, 2, 3, 1)).reshape(-1, c).astype(jnp.float32)
    labels = target.reshape(-1).astype(jnp.int32)
    logprob = jax.nn.log_softmax(logits, axis=-1)
    prob = jnp.exp(logprob)
    valid = labels != ignore_label
    lbl_safe = jnp.where(valid, labels, 0)
    idx = jnp.arange(labels.shape[0])
    p_at = prob[idx, lbl_safe]
    kept = valid & (p_at <= thresh)
    nll = -logprob[idx, lbl_safe]
    w_at = weights[lbl_safe]
    num = jnp.sum(jnp.where(kept, w_at * nll, 0.0))
    den = jnp.sum(jnp.where(kept, w_at, 0.0))
    return num / den


if __name__ == "__main__":
    key = jax.random.PRNGKey(0)
    k_logits, k_labels, k_ignore, k2_logits, k2_labels = jax.random.split(key, 5)

    weights = jnp.asarray(CLASS_WEIGHTS, jnp.float32)

    # Case A: n=2, hw=320 -> exercises multi-tile + tail-mask and single-block paths.
    n, c, h, w = 2, NUM_CLASSES, 16, 20
    predict = 3.0 * jax.random.normal(k_logits, (n, c, h, w), dtype=jnp.float32)
    target = jax.random.randint(k_labels, (n, h, w), 0, NUM_CLASSES, dtype=jnp.int32)
    ignore_mask = jax.random.bernoulli(k_ignore, 0.1, (n, h, w))
    target = jnp.where(ignore_mask, IGNORE_LABEL, target)

    ref = _reference_ohem(predict, target, weights, IGNORE_LABEL, THRESH)

    # A1: multiple pixel tiles per image + in-kernel tail mask (320 % 256 != 0)
    loss_tiled = jax.block_until_ready(
        ohem_cross_entropy_2d(predict, target, class_weights=CLASS_WEIGHTS, tile_hw=256))
    assert jnp.allclose(loss_tiled, ref, rtol=1e-4, atol=1e-5), (loss_tiled, ref)

    # A2: default large tile -> single full-extent block per image, no mask
    loss_full = jax.block_until_ready(
        ohem_cross_entropy_2d(predict, target, class_weights=CLASS_WEIGHTS))
    assert jnp.allclose(loss_full, ref, rtol=1e-4, atol=1e-5), (loss_full, ref)

    # Case B: n=1, hw=512, tile_hw=128 -> pixel tiles split across the second
    # "parallel" grid axis (v7x two-TensorCore balance path).
    n1, h1, w1 = 1, 16, 32
    predict1 = 3.0 * jax.random.normal(k2_logits, (n1, c, h1, w1), dtype=jnp.float32)
    target1 = jax.random.randint(k2_labels, (n1, h1, w1), 0, NUM_CLASSES, dtype=jnp.int32)
    ref1 = _reference_ohem(predict1, target1, weights, IGNORE_LABEL, THRESH)

    loss_split = jax.block_until_ready(
        ohem_cross_entropy_2d(predict1, target1, class_weights=CLASS_WEIGHTS, tile_hw=128))
    assert jnp.allclose(loss_split, ref1, rtol=1e-4, atol=1e-5), (loss_split, ref1)

    print("KERNEL_OK")
</pallas_src>

<mosaic_0001>
module attributes {stable_mosaic.version = 11 : i64} {
  func.func @_ohem_ce_kernel(%arg0: i32, %arg1: i32, %arg2: i32, %arg3: memref<1x19x256xf32, #tpu.memory_space<vmem>>, %arg4: memref<1x1x256xi32, #tpu.memory_space<vmem>>, %arg5: memref<1x19x1xf32, #tpu.memory_space<vmem>>, %arg6: memref<1x1x256xf32, #tpu.memory_space<vmem>>, %arg7: memref<1x1x256xf32, #tpu.memory_space<vmem>>) attributes {dimension_semantics = [#tpu.dimension_semantics<parallel>, #tpu.dimension_semantics<parallel>, #tpu.dimension_semantics<arbitrary>], iteration_bounds = array<i64: 2, 1, 2>, scalar_prefetch = 0 : i64, scratch_operands = 0 : i64, tpu.core_type = #tpu.core_type<tc>, window_params = [{transform_indices = @transform_0, window_bounds = array<i64: 1, 19, 256>}, {transform_indices = @transform_1, window_bounds = array<i64: 1, 1, 256>}, {pipeline_mode = #tpu.pipeline_mode<synchronous>, transform_indices = @transform_2, window_bounds = array<i64: 1, 19, 1>}, {transform_indices = @transform_3, window_bounds = array<i64: 1, 1, 256>}, {transform_indices = @transform_4, window_bounds = array<i64: 1, 1, 256>}]} {
    %c0_i32 = arith.constant 0 : i32
    %0 = arith.cmpi eq, %arg2, %c0_i32 : i32
    %1 = arith.extui %0 : i1 to i32
    %c0_i32_0 = arith.constant 0 : i32
    %2 = arith.cmpi ne, %1, %c0_i32_0 : i32
    scf.if %2 {
      %cst_29 = arith.constant 0.000000e+00 : f32
      %55 = vector.broadcast %cst_29 : f32 to vector<1x1x256xf32>
      %c0_30 = arith.constant 0 : index
      %c0_31 = arith.constant 0 : index
      %c0_32 = arith.constant 0 : index
      %56 = vector.load %arg6[%c0_30, %c0_31, %c0_32] : memref<1x1x256xf32, #tpu.memory_space<vmem>>, vector<1x1x256xf32>
      tpu.vector_store %arg6[%c0_30, %c0_31, %c0_32], %55 {strides = array<i32>} : memref<1x1x256xf32, #tpu.memory_space<vmem>>, vector<1x1x256xf32>,
      %cst_33 = arith.constant 0.000000e+00 : f32
      %57 = vector.broadcast %cst_33 : f32 to vector<1x1x256xf32>
      %c0_34 = arith.constant 0 : index
      %c0_35 = arith.constant 0 : index
      %c0_36 = arith.constant 0 : index
      %58 = vector.load %arg7[%c0_34, %c0_35, %c0_36] : memref<1x1x256xf32, #tpu.memory_space<vmem>>, vector<1x1x256xf32>
      tpu.vector_store %arg7[%c0_34, %c0_35, %c0_36], %57 {strides = array<i32>} : memref<1x1x256xf32, #tpu.memory_space<vmem>>, vector<1x1x256xf32>,
    } else {
    }
    %c0 = arith.constant 0 : index
    %c0_1 = arith.constant 0 : index
    %c0_2 = arith.constant 0 : index
    %3 = vector.load %arg3[%c0, %c0_1, %c0_2] : memref<1x19x256xf32, #tpu.memory_space<vmem>>, vector<1x19x256xf32>
    %c0_3 = arith.constant 0 : index
    %c0_4 = arith.constant 0 : index
    %c0_5 = arith.constant 0 : index
    %4 = vector.load %arg4[%c0_3, %c0_4, %c0_5] : memref<1x1x256xi32, #tpu.memory_space<vmem>>, vector<1x1x256xi32>
    %c0_6 = arith.constant 0 : index
    %c0_7 = arith.constant 0 : index
    %c0_8 = arith.constant 0 : index
    %5 = vector.load %arg5[%c0_6, %c0_7, %c0_8] : memref<1x19x1xf32, #tpu.memory_space<vmem>>, vector<1x19x1xf32>
    %cst = arith.constant dense<0xFF800000> : vector<1x256xf32>
    %6 = vector.multi_reduction <maximumf>, %3, %cst [1] : vector<1x19x256xf32> to vector<1x256xf32>
    %7 = vector.shape_cast %6 : vector<1x256xf32> to vector<1x1x256xf32>
    %8 = vector.broadcast %7 : vector<1x1x256xf32> to vector<1x19x256xf32>
    %9 = arith.subf %3, %8 : vector<1x19x256xf32>
    %10 = math.exp %9 : vector<1x19x256xf32>
    %cst_9 = arith.constant dense<0.000000e+00> : vector<1x256xf32>
    %11 = vector.multi_reduction <add>, %10, %cst_9 [1] : vector<1x19x256xf32> to vector<1x256xf32>
    %12 = vector.shape_cast %11 : vector<1x256xf32> to vector<1x1x256xf32>
    %13 = math.log %12 : vector<1x1x256xf32>
    %14 = tpu.iota {dimensions = array<i32: 1>} : vector<1x19x1xi32>
    %15 = vector.broadcast %14 : vector<1x19x1xi32> to vector<1x19x256xi32>
    %16 = vector.broadcast %4 : vector<1x1x256xi32> to vector<1x19x256xi32>
    %17 = arith.cmpi eq, %15, %16 : vector<1x19x256xi32>
    %cst_10 = arith.constant 0.000000e+00 : f32
    %18 = vector.broadcast %cst_10 : f32 to vector<1x19x256xf32>
    %19 = arith.select %17, %3, %18 : vector<1x19x256xi1>, vector<1x19x256xf32>
    %cst_11 = arith.constant dense<0.000000e+00> : vector<1x256xf32>
    %20 = vector.multi_reduction <add>, %19, %cst_11 [1] : vector<1x19x256xf32> to vector<1x256xf32>
    %21 = vector.shape_cast %20 : vector<1x256xf32> to vector<1x1x256xf32>
    %cst_12 = arith.constant 0.000000e+00 : f32
    %22 = vector.shape_cast %5 : vector<1x19x1xf32> to vector<1x19x1xf32>
    %23 = vector.broadcast %22 : vector<1x19x1xf32> to vector<1x19x256xf32>
    %24 = vector.broadcast %cst_12 : f32 to vector<1x19x256xf32>
    %25 = arith.select %17, %23, %24 : vector<1x19x256xi1>, vector<1x19x256xf32>
    %cst_13 = arith.constant dense<0.000000e+00> : vector<1x256xf32>
    %26 = vector.multi_reduction <add>, %25, %cst_13 [1] : vector<1x19x256xf32> to vector<1x256xf32>
    %27 = vector.shape_cast %26 : vector<1x256xf32> to vector<1x1x256xf32>
    %28 = arith.addf %7, %13 : vector<1x1x256xf32>
    %29 = arith.subf %28, %21 : vector<1x1x256xf32>
    %c255_i32 = arith.constant 255 : i32
    %30 = vector.broadcast %c255_i32 : i32 to vector<1x1x256xi32>
    %31 = arith.cmpi ne, %4, %30 : vector<1x1x256xi32>
    %cst_14 = arith.constant 0.510825634 : f32
    %32 = vector.broadcast %cst_14 : f32 to vector<1x1x256xf32>
    %33 = arith.cmpf oge, %29, %32 : vector<1x1x256xf32>
    %34 = arith.andi %31, %33 : vector<1x1x256xi1>
    %35 = tpu.iota {dimensions = array<i32: 2>} : vector<1x1x256xi32>
    %c2_i32 = arith.constant 2 : i32
    %36 = arith.muli %arg1, %c2_i32 : i32
    %37 = arith.addi %36, %arg2 : i32
    %c256_i32 = arith.constant 256 : i32
    %38 = arith.muli %37, %c256_i32 : i32
    %39 = vector.broadcast %38 : i32 to vector<1x1x256xi32>
    %40 = arith.addi %39, %35 : vector<1x1x256xi32>
    %c320_i32 = arith.constant 320 : i32
    %41 = vector.broadcast %c320_i32 : i32 to vector<1x1x256xi32>
    %42 = arith.cmpi slt, %40, %41 : vector<1x1x256xi32>
    %43 = arith.andi %34, %42 : vector<1x1x256xi1>
    %c0_15 = arith.constant 0 : index
    %c0_16 = arith.constant 0 : index
    %c0_17 = arith.constant 0 : index
    %44 = vector.load %arg6[%c0_15, %c0_16, %c0_17] : memref<1x1x256xf32, #tpu.memory_space<vmem>>, vector<1x1x256xf32>
    %45 = arith.mulf %27, %29 : vector<1x1x256xf32>
    %cst_18 = arith.constant 0.000000e+00 : f32
    %46 = vector.broadcast %cst_18 : f32 to vector<1x1x256xf32>
    %47 = arith.select %43, %45, %46 : vector<1x1x256xi1>, vector<1x1x256xf32>
    %48 = arith.addf %44, %47 : vector<1x1x256xf32>
    %c0_19 = arith.constant 0 : index
    %c0_20 = arith.constant 0 : index
    %c0_21 = arith.constant 0 : index
    %49 = vector.load %arg6[%c0_19, %c0_20, %c0_21] : memref<1x1x256xf32, #tpu.memory_space<vmem>>, vector<1x1x256xf32>
    tpu.vector_store %arg6[%c0_19, %c0_20, %c0_21], %48 {strides = array<i32>} : memref<1x1x256xf32, #tpu.memory_space<vmem>>, vector<1x1x256xf32>,
    %c0_22 = arith.constant 0 : index
    %c0_23 = arith.constant 0 : index
    %c0_24 = arith.constant 0 : index
    %50 = vector.load %arg7[%c0_22, %c0_23, %c0_24] : memref<1x1x256xf32, #tpu.memory_space<vmem>>, vector<1x1x256xf32>
    %cst_25 = arith.constant 0.000000e+00 : f32
    %51 = vector.broadcast %cst_25 : f32 to vector<1x1x256xf32>
    %52 = arith.select %43, %27, %51 : vector<1x1x256xi1>, vector<1x1x256xf32>
    %53 = arith.addf %50, %52 : vector<1x1x256xf32>
    %c0_26 = arith.constant 0 : index
    %c0_27 = arith.constant 0 : index
    %c0_28 = arith.constant 0 : index
    %54 = vector.load %arg7[%c0_26, %c0_27, %c0_28] : memref<1x1x256xf32, #tpu.memory_space<vmem>>, vector<1x1x256xf32>
    tpu.vector_store %arg7[%c0_26, %c0_27, %c0_28], %53 {strides = array<i32>} : memref<1x1x256xf32, #tpu.memory_space<vmem>>, vector<1x1x256xf32>,
    return
  }
  func.func @transform_0(%arg0: i32, %arg1: i32, %arg2: i32) -> (i32, i32, i32) {
    %c2_i32 = arith.constant 2 : i32
    %0 = arith.muli %arg1, %c2_i32 : i32
    %1 = arith.addi %0, %arg2 : i32
    %c0_i32 = arith.constant 0 : i32
    %c0_i32_0 = arith.constant 0 : i32
    return %arg0, %c0_i32, %1 : i32, i32, i32
  }
  func.func @transform_1(%arg0: i32, %arg1: i32, %arg2: i32) -> (i32, i32, i32) {
    %c2_i32 = arith.constant 2 : i32
    %0 = arith.muli %arg1, %c2_i32 : i32
    %1 = arith.addi %0, %arg2 : i32
    %c0_i32 = arith.constant 0 : i32
    %c0_i32_0 = arith.constant 0 : i32
    return %arg0, %c0_i32, %1 : i32, i32, i32
  }
  func.func @transform_2(%arg0: i32, %arg1: i32, %arg2: i32) -> (i32, i32, i32) {
    %c0_i32 = arith.constant 0 : i32
    %c0_i32_0 = arith.constant 0 : i32
    %c0_i32_1 = arith.constant 0 : i32
    %c0_i32_2 = arith.constant 0 : i32
    return %c0_i32, %c0_i32_0, %c0_i32_1 : i32, i32, i32
  }
  func.func @transform_3(%arg0: i32, %arg1: i32, %arg2: i32) -> (i32, i32, i32) {
    %c1_i32 = arith.constant 1 : i32
    %0 = arith.muli %arg0, %c1_i32 : i32
    %1 = arith.addi %0, %arg1 : i32
    %c0_i32 = arith.constant 0 : i32
    %c0_i32_0 = arith.constant 0 : i32
    %c0_i32_1 = arith.constant 0 : i32
    return %1, %c0_i32, %c0_i32_0 : i32, i32, i32
  }
  func.func @transform_4(%arg0: i32, %arg1: i32, %arg2: i32) -> (i32, i32, i32) {
    %c1_i32 = arith.constant 1 : i32
    %0 = arith.muli %arg0, %c1_i32 : i32
    %1 = arith.addi %0, %arg1 : i32
    %c0_i32 = arith.constant 0 : i32
    %c0_i32_0 = arith.constant 0 : i32
    %c0_i32_1 = arith.constant 0 : i32
    return %1, %c0_i32, %c0_i32_0 : i32, i32, i32
  }
}

</mosaic_0001>

<llo_original>
// kernel: tpu_custom_call.1
$region0: #{tpu_custom_call.1}
  #allocation0 [shape = 'u32[]', space=smem, size = 0x4, offset = 0x4, fixed_abs, tag = 'smem constant byte address 0x4 - core index']
  #allocation1 [shape = 'u32[144,128]{1,0:T(1,128)}', space=vmem, size = 0x12000, scoped, tag = 'internal scratch']
  %s0 = inlined_call_operand.vmem [shape: f32[2,19,320], index: 0, kind: input, shape index: {}]
  %s1 = inlined_call_operand.vmem [shape: s32[2,1,320], index: 1, kind: input, shape index: {}]
  %s2 = inlined_call_operand.vmem [shape: f32[1,19,1], index: 2, kind: input, shape index: {}]
  %s3 = inlined_call_operand.hbm [shape: f32[2,1,256], index: 3, kind: output, shape index: {0}]
  %s4 = inlined_call_operand.hbm [shape: f32[2,1,256], index: 4, kind: output, shape index: {1}]
  %5 = xla_tuple %s3, %s4
  %s6 = sld [smem:[#allocation0]]
  $region123: #{tpu_custom_call.1} parent=0
    _
  %s8 = ssub.s32 1, %s6
  %s9 = scalar_select 0, %s8, %s6
  $region1: #{tpu_custom_call.1} parent=0
    #allocation2 [shape = 'u8[49152]{0}', space=vmem, size = 0xc000, scoped, tag = 'input window, operand 0']
    #allocation3 [shape = 'u8[2048]{0}', space=vmem, size = 0x800, scoped, tag = 'output window, operand 0']
    #allocation4 [shape = 's32[2]{0}', space=sflag, size = 0x8, scoped, tag = 'scoped memory for tpu_custom_call.1']
    #allocation5 [shape = 'u8[2048]{0}', space=vmem, size = 0x800, scoped, tag = 'output window, operand 1']
    #allocation6 [shape = 's32[2]{0}', space=sflag, size = 0x8, scoped, tag = 'scoped memory for tpu_custom_call.1']
    %10 = vsyncpa [#allocation4], 0
    %s11 = scalar_lea.sflag [#allocation4], 1
    %12 = vsyncpa %s11, 0
    %13 = vsyncpa [#allocation6], 0
    %s14 = scalar_lea.sflag [#allocation6], 1
    %15 = vsyncpa %s14, 0
    loop: start=0, step=1, limit=6
    $region2: #{tpu_custom_call.1} parent=1 // loop_pre_header
      _
    $region3: #{tpu_custom_call.1} parent=1 // loop_header
      %s17 = sphi 0, %s21
      %p18 = scmp.ge.s32.totalorder %s17, 6
      %s24 = sphi 0, %s43
      %s25 = sphi 0, %s39
      %s26 = sphi 0, %s35
      %s27 = sphi 0, %s24
      %s28 = sphi 0, %s25
      %s29 = sphi 0, %s26
      %s30 = sphi 0, %s27
      %s31 = sphi 0, %s28
      %s32 = sphi 0, %s29
      %s52 = sphi 0, %s54
      %s55 = sphi 0, %s52
      %s56 = sphi 0, %s55
      %s72 = sphi 0, %s56
      %s84 = sphi 0, %s86
      %s87 = sphi 0, %s84
      %s88 = sphi 0, %s87
      %s104 = sphi 0, %s88
      %s108 = sphi 0, %s108
      %s110 = sphi 0, %s108
      %s111 = sphi 0, %s110
      %s125 = sphi 0, %s111
      %s133 = sphi 0, %s135
      %s136 = sphi 0, %s133
      %s137 = sphi 0, %s136
      %s153 = sphi 0, %s137
      %s161 = sphi 0, %s163
      %s164 = sphi 0, %s161
      %s165 = sphi 0, %s164
      %s181 = sphi 0, %s165
    $region4: #{tpu_custom_call.1} parent=1 // loop_header_branch
      %20 = sbr.rel (%p18) target = $region8
    $region5: #{tpu_custom_call.1} parent=1 // loop_body
      %s22 = ssub.s32 %s17, 1
      %s23 = ssub.s32 %s17, 2
      %s33 = sadd.s32 1, %s26
      %p34 = scmp.ge.s32.totalorder %s33, 2
      %s35 = scalar_select %p34, 0, %s33
      %s36 = sadd.s32 1, %s25
      %s37 = scalar_select %p34, %s36, %s25
      %p38 = scmp.ge.s32.totalorder %s37, 1
      %s39 = scalar_select %p38, 0, %s37
      %s40 = sadd.s32 1, %s24
      %s41 = scalar_select %p38, %s40, %s24
      %p42 = scmp.ge.s32.totalorder %s41, 2
      %s43 = scalar_select %p42, 0, %s41
      %s44 = smul.u32 %s25, 2
      %s45 = sadd.s32 %s44, %s26
      %s46 = smul.u32 %s39, 2
      %s47 = sadd.s32 %s46, %s35
      %s48 = ssub.s32 %s24, %s43
      %s49 = ssub.s32 %s45, %s47
      %s50 = sor.u32 %s48, %s49
      %p51 = scmp.eq.s32.totalorder %s50, 0
      %s53 = sadd.s32 %s52, 1
      %s54 = scalar_select %p51, %s52, %s53
      %p57 = pneg %p51
      %p58 = scmp.eq.s32.totalorder %s17, 3
      %p59 = por %p57, %p58
      %p60 = scmp.ne.s32.totalorder %s52, %s55
      %p61 = scmp.eq.s32.totalorder %s17, 0
      %p62 = por %p60, %p61
      %p63 = scmp.ne.s32.totalorder %s52, %s55
      %p64 = scmp.eq.s32.totalorder %s22, 3
      %p65 = por %p63, %p64
      %p66 = scmp.ne.s32.totalorder %s55, %s56
      %p67 = scmp.eq.s32.totalorder %s22, 0
      %p68 = por %p66, %p67
      %p69 = scmp.ne.s32.totalorder %s55, %s56
      %p70 = scmp.eq.s32.totalorder %s23, 3
      %p71 = por %p69, %p70
      %p73 = scmp.ne.s32.totalorder %s56, %s72
      %p74 = scmp.eq.s32.totalorder %s23, 0
      %p75 = por %p73, %p74
      %s76 = smul.u32 %s25, 2
      %s77 = sadd.s32 %s76, %s26
      %s78 = smul.u32 %s39, 2
      %s79 = sadd.s32 %s78, %s35
      %s80 = ssub.s32 %s24, %s43
      %s81 = ssub.s32 %s77, %s79
      %s82 = sor.u32 %s80, %s81
      %p83 = scmp.eq.s32.totalorder %s82, 0
      %s85 = sadd.s32 %s84, 1
      %s86 = scalar_select %p83, %s84, %s85
      %p89 = pneg %p83
      %p90 = scmp.eq.s32.totalorder %s17, 3
      %p91 = por %p89, %p90
      %p92 = scmp.ne.s32.totalorder %s84, %s87
      %p93 = scmp.eq.s32.totalorder %s17, 0
      %p94 = por %p92, %p93
      %p95 = scmp.ne.s32.totalorder %s84, %s87
      %p96 = scmp.eq.s32.totalorder %s22, 3
      %p97 = por %p95, %p96
      %p98 = scmp.ne.s32.totalorder %s87, %s88
      %p99 = scmp.eq.s32.totalorder %s22, 0
      %p100 = por %p98, %p99
      %p101 = scmp.ne.s32.totalorder %s87, %s88
      %p102 = scmp.eq.s32.totalorder %s23, 3
      %p103 = por %p101, %p102
      %p105 = scmp.ne.s32.totalorder %s88, %s104
      %p106 = scmp.eq.s32.totalorder %s23, 0
      %p107 = por %p105, %p106
      %s109 = sadd.s32 %s108, 1
      %p112 = scmp.eq.s32.totalorder %s17, 3
      %p113 = scmp.ne.s32.totalorder %s108, %s110
      %p114 = scmp.eq.s32.totalorder %s17, 0
      %p115 = por %p113, %p114
      %p116 = scmp.ne.s32.totalorder %s108, %s110
      %p117 = scmp.eq.s32.totalorder %s22, 3
      %p118 = por %p116, %p117
      %p119 = scmp.ne.s32.totalorder %s110, %s111
      %p120 = scmp.eq.s32.totalorder %s22, 0
      %p121 = por %p119, %p120
      %p122 = scmp.ne.s32.totalorder %s110, %s111
      %p123 = scmp.eq.s32.totalorder %s23, 3
      %p124 = por %p122, %p123
      %p126 = scmp.ne.s32.totalorder %s111, %s125
      %p127 = scmp.eq.s32.totalorder %s23, 0
      %p128 = por %p126, %p127
      %s129 = sadd.s32 %s24, %s25
      %s130 = sadd.s32 %s43, %s39
      %s131 = ssub.s32 %s129, %s130
      %p132 = scmp.eq.s32.totalorder %s131, 0
      %s134 = sadd.s32 %s133, 1
      %s135 = scalar_select %p132, %s133, %s134
      %p138 = pneg %p132
      %p139 = scmp.eq.s32.totalorder %s17, 3
      %p140 = por %p138, %p139
      %p141 = scmp.ne.s32.totalorder %s133, %s136
      %p142 = scmp.eq.s32.totalorder %s17, 0
      %p143 = por %p141, %p142
      %p144 = scmp.ne.s32.totalorder %s133, %s136
      %p145 = scmp.eq.s32.totalorder %s22, 3
      %p146 = por %p144, %p145
      %p147 = scmp.ne.s32.totalorder %s136, %s137
      %p148 = scmp.eq.s32.totalorder %s22, 0
      %p149 = por %p147, %p148
      %p150 = scmp.ne.s32.totalorder %s136, %s137
      %p151 = scmp.eq.s32.totalorder %s23, 3
      %p152 = por %p150, %p151
      %p154 = scmp.ne.s32.totalorder %s137, %s153
      %p155 = scmp.eq.s32.totalorder %s23, 0
      %p156 = por %p154, %p155
      %s157 = sadd.s32 %s24, %s25
      %s158 = sadd.s32 %s43, %s39
      %s159 = ssub.s32 %s157, %s158
      %p160 = scmp.eq.s32.totalorder %s159, 0
      %s162 = sadd.s32 %s161, 1
      %s163 = scalar_select %p160, %s161, %s162
      %p166 = pneg %p160
      %p167 = scmp.eq.s32.totalorder %s17, 3
      %p168 = por %p166, %p167
      %p169 = scmp.ne.s32.totalorder %s161, %s164
      %p170 = scmp.eq.s32.totalorder %s17, 0
      %p171 = por %p169, %p170
      %p172 = scmp.ne.s32.totalorder %s161, %s164
      %p173 = scmp.eq.s32.totalorder %s22, 3
      %p174 = por %p172, %p173
      %p175 = scmp.ne.s32.totalorder %s164, %s165
      %p176 = scmp.eq.s32.totalorder %s22, 0
      %p177 = por %p175, %p176
      %p178 = scmp.ne.s32.totalorder %s164, %s165
      %p179 = scmp.eq.s32.totalorder %s23, 3
      %p180 = por %p178, %p179
      %p182 = scmp.ne.s32.totalorder %s165, %s181
      %p183 = scmp.eq.s32.totalorder %s23, 0
      %p184 = por %p182, %p183
      %p185 = scmp.le.s32.totalorder 1, %s17
      %p186 = scmp.lt.s32.totalorder %s17, 5
      %p187 = pnand %p185, %p186
      %p188 = pneg %p187
      // Predicated region
      $region9: #{tpu_custom_call.1} parent=5 // pred_check
        _
      $region10: #{tpu_custom_call.1} parent=5 // pred_check_branch
        %190 = sbr.rel (%p187) target = $region12
      $region11: #{tpu_custom_call.1} parent=5 // pred_region
        %s191 = ssub.s32 %s17, 1
        // Predicated region
        $region13: #{tpu_custom_call.1} parent=11 // pred_check
          %p192 = pneg %p121
        $region14: #{tpu_custom_call.1} parent=11 // pred_check_branch
          %194 = sbr.rel (%p192) target = $region16
        $region15: #{tpu_custom_call.1} parent=11 // pred_region
          _
        $region16: #{tpu_custom_call.1} parent=11 // pred_fallthru
          _
      $region12: #{tpu_custom_call.1} parent=5 // pred_fallthru
        _
      %p195 = scmp.lt.s32.totalorder %s17, 4
      // Predicated region
      $region17: #{tpu_custom_call.1} parent=5 // pred_check
        %p196 = pneg %p195
      $region18: #{tpu_custom_call.1} parent=5 // pred_check_branch
        %198 = sbr.rel (%p196) target = $region20
      $region19: #{tpu_custom_call.1} parent=5 // pred_region
        // Predicated region
        $region21: #{tpu_custom_call.1} parent=19 // pred_check
          %p199 = pneg %p62
        $region22: #{tpu_custom_call.1} parent=19 // pred_check_branch
          %201 = sbr.rel (%p199) target = $region24
        $region23: #{tpu_custom_call.1} parent=19 // pred_region
          %s202 = sand.u32 %s52, 1
          %s203 = sand.u32 %s52, 1
          %s204 = smul.addr %s203, 48
          %s205 = scalar_lea.vmem [#allocation2], %s204
          %s206 = smul.u32 %s25, 2
          %s207 = sadd.s32 %s206, %s26
          %s208 = smul.u32 2, %s207
          %s209 = ssub.s32 3, %s208
          %p210 = scmp.lt.s32.totalorder %s209, 2
          %s211 = scalar_select %p210, %s209, 2
          %s212 = smul.u32 384, %s211
          %p213 = scmp.ne.s32.totalorder 0, %s212
          %s214 = smul.addr %s24, 9
          %s215 = sadd.s32 %s208, %s214
          %s216 = smul.addr %s215, 8
          %s217 = scalar_lea.vmem %s0, %s216
          %s218 = smul.u32 %s211, 8
          // Predicated region
          $region25: #{tpu_custom_call.1} parent=23 // pred_check
            %p219 = pneg %p213
          $region26: #{tpu_custom_call.1} parent=23 // pred_check_branch
            %221 = sbr.rel (%p219) target = $region28
          $region27: #{tpu_custom_call.1} parent=23 // pred_region
            %p222 = scmp.lt.u32.totalorder %s218, 8
            %p223 = pneg %p222
            // Predicated region
            $region29: #{tpu_custom_call.1} parent=27 // pred_check
              _
            $region30: #{tpu_custom_call.1} parent=27 // pred_check_branch
              %225 = sbr.rel (%p222) target = $region32
            $region31: #{tpu_custom_call.1} parent=27 // pred_region
              %s244 = sand.u32 %s218, 7
              %p245 = scmp.eq.s32.totalorder %s244, 0
              // Predicated region
              $region44: #{tpu_custom_call.1} parent=31 // pred_check
                %p246 = pneg %p245
              $region45: #{tpu_custom_call.1} parent=31 // pred_check_branch
                %248 = sbr.rel (%p246) target = $region47
              $region46: #{tpu_custom_call.1} parent=31 // pred_region
                %s249 = sshrl.u32 %s218, 3
                %s250 = sdiv.u32.pop %s249, 24
                %s251 = srem.u32.pop %s249, 24
                // While loop
                $region48: #{tpu_custom_call.1} parent=46 // loop_pre_header
                  _
                $region49: #{tpu_custom_call.1} parent=46 // loop_header
                  %s255 = sphi 0, %s257
                  %p256 = scmp.ge.s32.totalorder %s255, %s250
                  %s260 = sphi 0, %s409
                  %s261 = sphi %s217, %s412
                  %s262 = sphi %s205, %s413
                $region50: #{tpu_custom_call.1} parent=46 // loop_header_branch
                  %259 = sbr.rel (%p256) target = $region54
                $region51: #{tpu_custom_call.1} parent=46 // loop_body
                  %v263 = vld [vmem:[%s261] sm:$0xff]
                  %264 = vst [vmem:[%s262] sm:$0xff] %v263
                  %v265 = vld [vmem:[%s261 + $0x8] sm:$0xff]
                  %266 = vst [vmem:[%s262 + $0x8] sm:$0xff] %v265
                  %v267 = vld [vmem:[%s261 + $0x10] sm:$0xff]
                  %268 = vst [vmem:[%s262 + $0x10] sm:$0xff] %v267
                  %v269 = vld [vmem:[%s261 + $0x18] sm:$0xff]
                  %270 = vst [vmem:[%s262 + $0x18] sm:$0xff] %v269
                  %v271 = vld [vmem:[%s261 + $0x20] sm:$0xff]
                  %272 = vst [vmem:[%s262 + $0x20] sm:$0xff] %v271
                  %v273 = vld [vmem:[%s261 + $0x28] sm:$0xff]
                  %274 = vst [vmem:[%s262 + $0x28] sm:$0xff] %v273
                  %v275 = vld [vmem:[%s261 + $0x30] sm:$0xff]
                  %276 = vst [vmem:[%s262 + $0x30] sm:$0xff] %v275
                  %v277 = vld [vmem:[%s261 + $0x38] sm:$0xff]
                  %278 = vst [vmem:[%s262 + $0x38] sm:$0xff] %v277
                  %v279 = vld [vmem:[%s261 + $0x40] sm:$0xff]
                  %280 = vst [vmem:[%s262 + $0x40] sm:$0xff] %v279
                  %v281 = vld [vmem:[%s261 + $0x48] sm:$0xff]
                  %282 = vst [vmem:[%s262 + $0x48] sm:$0xff] %v281
                  %v283 = vld [vmem:[%s261 + $0x50] sm:$0xff]
                  %284 = vst [vmem:[%s262 + $0x50] sm:$0xff] %v283
                  %v285 = vld [vmem:[%s261 + $0x58] sm:$0xff]
                  %286 = vst [vmem:[%s262 + $0x58] sm:$0xff] %v285
                  %v287 = vld [vmem:[%s261 + $0x60] sm:$0xff]
                  %288 = vst [vmem:[%s262 + $0x60] sm:$0xff] %v287
                  %v289 = vld [vmem:[%s261 + $0x68] sm:$0xff]
                  %290 = vst [vmem:[%s262 + $0x68] sm:$0xff] %v289
                  %v291 = vld [vmem:[%s261 + $0x70] sm:$0xff]
                  %292 = vst [vmem:[%s262 + $0x70] sm:$0xff] %v291
                  %v293 = vld [vmem:[%s261 + $0x78] sm:$0xff]
                  %294 = vst [vmem:[%s262 + $0x78] sm:$0xff] %v293
                  %v295 = vld [vmem:[%s261 + $0x80] sm:$0xff]
                  %296 = vst [vmem:[%s262 + $0x80] sm:$0xff] %v295
                  %v297 = vld [vmem:[%s261 + $0x88] sm:$0xff]
                  %298 = vst [vmem:[%s262 + $0x88] sm:$0xff] %v297
                  %v299 = vld [vmem:[%s261 + $0x90] sm:$0xff]
                  %300 = vst [vmem:[%s262 + $0x90] sm:$0xff] %v299
                  %v301 = vld [vmem:[%s261 + $0x98] sm:$0xff]
                  %302 = vst [vmem:[%s262 + $0x98] sm:$0xff] %v301
                  %v303 = vld [vmem:[%s261 + $0xa0] sm:$0xff]
                  %304 = vst [vmem:[%s262 + $0xa0] sm:$0xff] %v303
                  %v305 = vld [vmem:[%s261 + $0xa8] sm:$0xff]
                  %306 = vst [vmem:[%s262 + $0xa8] sm:$0xff] %v305
                  %v307 = vld [vmem:[%s261 + $0xb0] sm:$0xff]
                  %308 = vst [vmem:[%s262 + $0xb0] sm:$0xff] %v307
                  %v309 = vld [vmem:[%s261 + $0xb8] sm:$0xff]
                  %310 = vst [vmem:[%s262 + $0xb8] sm:$0xff] %v309
                  %v311 = vld [vmem:[%s261 + $0x18] sm:$0xff]
                  %312 = vst [vmem:[%s262 + $0x10] sm:$0xff] %v311
                  %v313 = vld [vmem:[%s261 + $0x20] sm:$0xff]
                  %314 = vst [vmem:[%s262 + $0x18] sm:$0xff] %v313
                  %v315 = vld [vmem:[%s261 + $0x28] sm:$0xff]
                  %316 = vst [vmem:[%s262 + $0x20] sm:$0xff] %v315
                  %v317 = vld [vmem:[%s261 + $0x30] sm:$0xff]
                  %318 = vst [vmem:[%s262 + $0x28] sm:$0xff] %v317
                  %v319 = vld [vmem:[%s261 + $0x38] sm:$0xff]
                  %320 = vst [vmem:[%s262 + $0x30] sm:$0xff] %v319
                  %v321 = vld [vmem:[%s261 + $0x40] sm:$0xff]
                  %322 = vst [vmem:[%s262 + $0x38] sm:$0xff] %v321
                  %v323 = vld [vmem:[%s261 + $0x48] sm:$0xff]
                  %324 = vst [vmem:[%s262 + $0x40] sm:$0xff] %v323
                  %v325 = vld [vmem:[%s261 + $0x50] sm:$0xff]
                  %326 = vst [vmem:[%s262 + $0x48] sm:$0xff] %v325
                  %v327 = vld [vmem:[%s261 + $0x58] sm:$0xff]
                  %328 = vst [vmem:[%s262 + $0x50] sm:$0xff] %v327
                  %v329 = vld [vmem:[%s261 + $0x60] sm:$0xff]
                  %330 = vst [vmem:[%s262 + $0x58] sm:$0xff] %v329
                  %v331 = vld [vmem:[%s261 + $0x68] sm:$0xff]
                  %332 = vst [vmem:[%s262 + $0x60] sm:$0xff] %v331
                  %v333 = vld [vmem:[%s261 + $0x70] sm:$0xff]
                  %334 = vst [vmem:[%s262 + $0x68] sm:$0xff] %v333
                  %v335 = vld [vmem:[%s261 + $0x78] sm:$0xff]
                  %336 = vst [vmem:[%s262 + $0x70] sm:$0xff] %v335
                  %v337 = vld [vmem:[%s261 + $0x80] sm:$0xff]
                  %338 = vst [vmem:[%s262 + $0x78] sm:$0xff] %v337
                  %v339 = vld [vmem:[%s261 + $0x88] sm:$0xff]
                  %340 = vst [vmem:[%s262 + $0x80] sm:$0xff] %v339
                  %v341 = vld [vmem:[%s261 + $0x90] sm:$0xff]
                  %342 = vst [vmem:[%s262 + $0x88] sm:$0xff] %v341
                  %v343 = vld [vmem:[%s261 + $0x98] sm:$0xff]
                  %344 = vst [vmem:[%s262 + $0x90] sm:$0xff] %v343
                  %v345 = vld [vmem:[%s261 + $0xa0] sm:$0xff]
                  %346 = vst [vmem:[%s262 + $0x98] sm:$0xff] %v345
                  %v347 = vld [vmem:[%s261 + $0xa8] sm:$0xff]
                  %348 = vst [vmem:[%s262 + $0xa0] sm:$0xff] %v347
                  %v349 = vld [vmem:[%s261 + $0xb0] sm:$0xff]
                  %350 = vst [vmem:[%s262 + $0xa8] sm:$0xff] %v349
                  %v351 = vld [vmem:[%s261 + $0xb8] sm:$0xff]
                  %352 = vst [vmem:[%s262 + $0xb0] sm:$0xff] %v351
                  %v353 = vld [vmem:[%s261 + $0xc0] sm:$0xff]
                  %354 = vst [vmem:[%s262 + $0xb8] sm:$0xff] %v353
                  %v355 = vld [vmem:[%s261 + $0xc8] sm:$0xff]
                  %356 = vst [vmem:[%s262 + $0xc0] sm:$0xff] %v355
                  %v357 = vld [vmem:[%s261 + $0xd0] sm:$0xff]
                  %358 = vst [vmem:[%s262 + $0xc8] sm:$0xff] %v357
                  %v359 = vld [vmem:[%s261 + $0x30] sm:$0xff]
                  %360 = vst [vmem:[%s262 + $0x20] sm:$0xff] %v359
                  %v361 = vld [vmem:[%s261 + $0x38] sm:$0xff]
                  %362 = vst [vmem:[%s262 + $0x28] sm:$0xff] %v361
                  %v363 = vld [vmem:[%s261 + $0x40] sm:$0xff]
                  %364 = vst [vmem:[%s262 + $0x30] sm:$0xff] %v363
                  %v365 = vld [vmem:[%s261 + $0x48] sm:$0xff]
                  %366 = vst [vmem:[%s262 + $0x38] sm:$0xff] %v365
                  %v367 = vld [vmem:[%s261 + $0x50] sm:$0xff]
                  %368 = vst [vmem:[%s262 + $0x40] sm:$0xff] %v367
                  %v369 = vld [vmem:[%s261 + $0x58] sm:$0xff]
                  %370 = vst [vmem:[%s262 + $0x48] sm:$0xff] %v369
                  %v371 = vld [vmem:[%s261 + $0x60] sm:$0xff]
                  %372 = vst [vmem:[%s262 + $0x50] sm:$0xff] %v371
                  %v373 = vld [vmem:[%s261 + $0x68] sm:$0xff]
                  %374 = vst [vmem:[%s262 + $0x58] sm:$0xff] %v373
                  %v375 = vld [vmem:[%s261 + $0x70] sm:$0xff]
                  %376 = vst [vmem:[%s262 + $0x60] sm:$0xff] %v375
                  %v377 = vld [vmem:[%s261 + $0x78] sm:$0xff]
                  %378 = vst [vmem:[%s262 + $0x68] sm:$0xff] %v377
                  %v379 = vld [vmem:[%s261 + $0x80] sm:$0xff]
                  %380 = vst [vmem:[%s262 + $0x70] sm:$0xff] %v379
                  %v381 = vld [vmem:[%s261 + $0x88] sm:$0xff]
                  %382 = vst [vmem:[%s262 + $0x78] sm:$0xff] %v381
                  %v383 = vld [vmem:[%s261 + $0x90] sm:$0xff]
                  %384 = vst [vmem:[%s262 + $0x80] sm:$0xff] %v383
                  %v385 = vld [vmem:[%s261 + $0x98] sm:$0xff]
                  %386 = vst [vmem:[%s262 + $0x88] sm:$0xff] %v385
                  %v387 = vld [vmem:[%s261 + $0xa0] sm:$0xff]
                  %388 = vst [vmem:[%s262 + $0x90] sm:$0xff] %v387
                  %v389 = vld [vmem:[%s261 + $0xa8] sm:$0xff]
                  %390 = vst [vmem:[%s262 + $0x98] sm:$0xff] %v389
                  %v391 = vld [vmem:[%s261 + $0xb0] sm:$0xff]
                  %392 = vst [vmem:[%s262 + $0xa0] sm:$0xff] %v391
                  %v393 = vld [vmem:[%s261 + $0xb8] sm:$0xff]
                  %394 = vst [vmem:[%s262 + $0xa8] sm:$0xff] %v393
                  %v395 = vld [vmem:[%s261 + $0xc0] sm:$0xff]
                  %396 = vst [vmem:[%s262 + $0xb0] sm:$0xff] %v395
                  %v397 = vld [vmem:[%s261 + $0xc8] sm:$0xff]
                  %398 = vst [vmem:[%s262 + $0xb8] sm:$0xff] %v397
                  %v399 = vld [vmem:[%s261 + $0xd0] sm:$0xff]
                  %400 = vst [vmem:[%s262 + $0xc0] sm:$0xff] %v399
                  %v401 = vld [vmem:[%s261 + $0xd8] sm:$0xff]
                  %402 = vst [vmem:[%s262 + $0xc8] sm:$0xff] %v401
                  %v403 = vld [vmem:[%s261 + $0xe0] sm:$0xff]
                  %404 = vst [vmem:[%s262 + $0xd0] sm:$0xff] %v403
                  %v405 = vld [vmem:[%s261 + $0xe8] sm:$0xff]
                  %406 = vst [vmem:[%s262 + $0xd8] sm:$0xff] %v405
                  %s407 = sadd.s32 1, %s260
                  %p408 = scmp.ge.s32.totalorder %s407, %s250
                  %s409 = scalar_select %p408, 0, %s407
                  %s410 = smul.u32 %s409, 192
                  %s411 = smul.u32 %s409, 192
                  %s412 = scalar_lea.vmem %s217, %s410
                  %s413 = scalar_lea.vmem %s205, %s411 [#allocation2]
                $region52: #{tpu_custom_call.1} parent=46 // loop_footer
                  %s257 = sadd.s32 %s255, 1
                $region53: #{tpu_custom_call.1} parent=46 // loop_footer_branch
                  %254 = sbr.rel target = $region49
                $region54: #{tpu_custom_call.1} parent=46 // loop_exit
                  _
                %s414 = sdiv.u32.pop %s249, 24
                %s415 = srem.u32.pop %s249, 24
                %s416 = smul.u32 %s414, 24
                %s417 = smul.u32 128, %s416
                %s418 = sshra.s32 %s417, 4
                %s419 = scalar_lea.vmem %s217, %s418
                %s420 = smul.u32 128, %s416
                %s421 = sshra.s32 %s420, 4
                %s422 = scalar_lea.vmem %s205, %s421 [#allocation2]
                // While loop
                $region55: #{tpu_custom_call.1} parent=46 // loop_pre_header
                  _
                $region56: #{tpu_custom_call.1} parent=46 // loop_header
                  %s426 = sphi 0, %s428
                  %p427 = scmp.ge.s32.totalorder %s426, %s415
                  %s431 = sphi 0, %s442
                  %s432 = sphi %s419, %s445
                  %s433 = sphi %s422, %s446
                $region57: #{tpu_custom_call.1} parent=46 // loop_header_branch
                  %430 = sbr.rel (%p427) target = $region61
                $region58: #{tpu_custom_call.1} parent=46 // loop_body
                  %v434 = vld [vmem:[%s432] sm:$0xff]
                  %435 = vst [vmem:[%s433] sm:$0xff] %v434
                  %v436 = vld [vmem:[%s432 + $0x18] sm:$0xff]
                  %437 = vst [vmem:[%s433 + $0x10] sm:$0xff] %v436
                  %v438 = vld [vmem:[%s432 + $0x30] sm:$0xff]
                  %439 = vst [vmem:[%s433 + $0x20] sm:$0xff] %v438
                  %s440 = sadd.s32 1, %s431
                  %p441 = scmp.ge.s32.totalorder %s440, %s415
                  %s442 = scalar_select %p441, 0, %s440
                  %s443 = smul.u32 %s442, 8
                  %s444 = smul.u32 %s442, 8
                  %s445 = scalar_lea.vmem %s419, %s443
                  %s446 = scalar_lea.vmem %s422, %s444 [#allocation2]
                $region59: #{tpu_custom_call.1} parent=46 // loop_footer
                  %s428 = sadd.s32 %s426, 1
                $region60: #{tpu_custom_call.1} parent=46 // loop_footer_branch
                  %425 = sbr.rel target = $region56
                $region61: #{tpu_custom_call.1} parent=46 // loop_exit
                  _
              $region47: #{tpu_custom_call.1} parent=31 // pred_fallthru
                _
              %p447 = pneg %p245
              // Predicated region
              $region62: #{tpu_custom_call.1} parent=31 // pred_check
                _
              $region63: #{tpu_custom_call.1} parent=31 // pred_check_branch
                %449 = sbr.rel (%p245) target = $region65
              $region64: #{tpu_custom_call.1} parent=31 // pred_region
                %s450 = sand.u32 %s218, 7
                %s451 = ssub.s32 %s218, %s450
                %s452 = scalar_lea.vmem %s217, %s451
                %s453 = ssub.s32 %s218, %s450
                %s454 = scalar_lea.vmem %s205, %s453 [#allocation2]
                %s455 = sshrl.u32 %s218, 3
                %s456 = sdiv.u32.pop %s455, 24
                %s457 = srem.u32.pop %s455, 24
                // While loop
                $region66: #{tpu_custom_call.1} parent=64 // loop_pre_header
                  _
                $region67: #{tpu_custom_call.1} parent=64 // loop_header
                  %s461 = sphi 0, %s463
                  %p462 = scmp.ge.s32.totalorder %s461, %s456
                  %s466 = sphi 0, %s615
                  %s467 = sphi %s217, %s618
                  %s468 = sphi %s205, %s619
                $region68: #{tpu_custom_call.1} parent=64 // loop_header_branch
                  %465 = sbr.rel (%p462) target = $region72
                $region69: #{tpu_custom_call.1} parent=64 // loop_body
                  %v469 = vld [vmem:[%s467] sm:$0xff]
                  %470 = vst [vmem:[%s468] sm:$0xff] %v469
                  %v471 = vld [vmem:[%s467 + $0x8] sm:$0xff]
                  %472 = vst [vmem:[%s468 + $0x8] sm:$0xff] %v471
                  %v473 = vld [vmem:[%s467 + $0x10] sm:$0xff]
                  %474 = vst [vmem:[%s468 + $0x10] sm:$0xff] %v473
                  %v475 = vld [vmem:[%s467 + $0x18] sm:$0xff]
                  %476 = vst [vmem:[%s468 + $0x18] sm:$0xff] %v475
                  %v477 = vld [vmem:[%s467 + $0x20] sm:$0xff]
                  %478 = vst [vmem:[%s468 + $0x20] sm:$0xff] %v477
                  %v479 = vld [vmem:[%s467 + $0x28] sm:$0xff]
                  %480 = vst [vmem:[%s468 + $0x28] sm:$0xff] %v479
                  %v481 = vld [vmem:[%s467 + $0x30] sm:$0xff]
                  %482 = vst [vmem:[%s468 + $0x30] sm:$0xff] %v481
                  %v483 = vld [vmem:[%s467 + $0x38] sm:$0xff]
                  %484 = vst [vmem:[%s468 + $0x38] sm:$0xff] %v483
                  %v485 = vld [vmem:[%s467 + $0x40] sm:$0xff]
                  %486 = vst [vmem:[%s468 + $0x40] sm:$0xff] %v485
                  %v487 = vld [vmem:[%s467 + $0x48] sm:$0xff]
                  %488 = vst [vmem:[%s468 + $0x48] sm:$0xff] %v487
                  %v489 = vld [vmem:[%s467 + $0x50] sm:$0xff]
                  %490 = vst [vmem:[%s468 + $0x50] sm:$0xff] %v489
                  %v491 = vld [vmem:[%s467 + $0x58] sm:$0xff]
                  %492 = vst [vmem:[%s468 + $0x58] sm:$0xff] %v491
                  %v493 = vld [vmem:[%s467 + $0x60] sm:$0xff]
                  %494 = vst [vmem:[%s468 + $0x60] sm:$0xff] %v493
                  %v495 = vld [vmem:[%s467 + $0x68] sm:$0xff]
                  %496 = vst [vmem:[%s468 + $0x68] sm:$0xff] %v495
                  %v497 = vld [vmem:[%s467 + $0x70] sm:$0xff]
                  %498 = vst [vmem:[%s468 + $0x70] sm:$0xff] %v497
                  %v499 = vld [vmem:[%s467 + $0x78] sm:$0xff]
                  %500 = vst [vmem:[%s468 + $0x78] sm:$0xff] %v499
                  %v501 = vld [vmem:[%s467 + $0x80] sm:$0xff]
                  %502 = vst [vmem:[%s468 + $0x80] sm:$0xff] %v501
                  %v503 = vld [vmem:[%s467 + $0x88] sm:$0xff]
                  %504 = vst [vmem:[%s468 + $0x88] sm:$0xff] %v503
                  %v505 = vld [vmem:[%s467 + $0x90] sm:$0xff]
                  %506 = vst [vmem:[%s468 + $0x90] sm:$0xff] %v505
                  %v507 = vld [vmem:[%s467 + $0x98] sm:$0xff]
                  %508 = vst [vmem:[%s468 + $0x98] sm:$0xff] %v507
                  %v509 = vld [vmem:[%s467 + $0xa0] sm:$0xff]
                  %510 = vst [vmem:[%s468 + $0xa0] sm:$0xff] %v509
                  %v511 = vld [vmem:[%s467 + $0xa8] sm:$0xff]
                  %512 = vst [vmem:[%s468 + $0xa8] sm:$0xff] %v511
                  %v513 = vld [vmem:[%s467 + $0xb0] sm:$0xff]
                  %514 = vst [vmem:[%s468 + $0xb0] sm:$0xff] %v513
                  %v515 = vld [vmem:[%s467 + $0xb8] sm:$0xff]
                  %516 = vst [vmem:[%s468 + $0xb8] sm:$0xff] %v515
                  %v517 = vld [vmem:[%s467 + $0x18] sm:$0xff]
                  %518 = vst [vmem:[%s468 + $0x10] sm:$0xff] %v517
                  %v519 = vld [vmem:[%s467 + $0x20] sm:$0xff]
                  %520 = vst [vmem:[%s468 + $0x18] sm:$0xff] %v519
                  %v521 = vld [vmem:[%s467 + $0x28] sm:$0xff]
                  %522 = vst [vmem:[%s468 + $0x20] sm:$0xff] %v521
                  %v523 = vld [vmem:[%s467 + $0x30] sm:$0xff]
                  %524 = vst [vmem:[%s468 + $0x28] sm:$0xff] %v523
                  %v525 = vld [vmem:[%s467 + $0x38] sm:$0xff]
                  %526 = vst [vmem:[%s468 + $0x30] sm:$0xff] %v525
                  %v527 = vld [vmem:[%s467 + $0x40] sm:$0xff]
                  %528 = vst [vmem:[%s468 + $0x38] sm:$0xff] %v527
                  %v529 = vld [vmem:[%s467 + $0x48] sm:$0xff]
                  %530 = vst [vmem:[%s468 + $0x40] sm:$0xff] %v529
                  %v531 = vld [vmem:[%s467 + $0x50] sm:$0xff]
                  %532 = vst [vmem:[%s468 + $0x48] sm:$0xff] %v531
                  %v533 = vld [vmem:[%s467 + $0x58] sm:$0xff]
                  %534 = vst [vmem:[%s468 + $0x50] sm:$0xff] %v533
                  %v535 = vld [vmem:[%s467 + $0x60] sm:$0xff]
                  %536 = vst [vmem:[%s468 + $0x58] sm:$0xff] %v535
                  %v537 = vld [vmem:[%s467 + $0x68] sm:$0xff]
                  %538 = vst [vmem:[%s468 + $0x60] sm:$0xff] %v537
                  %v539 = vld [vmem:[%s467 + $0x70] sm:$0xff]
                  %540 = vst [vmem:[%s468 + $0x68] sm:$0xff] %v539
                  %v541 = vld [vmem:[%s467 + $0x78] sm:$0xff]
                  %542 = vst [vmem:[%s468 + $0x70] sm:$0xff] %v541
                  %v543 = vld [vmem:[%s467 + $0x80] sm:$0xff]
                  %544 = vst [vmem:[%s468 + $0x78] sm:$0xff] %v543
                  %v545 = vld [vmem:[%s467 + $0x88] sm:$0xff]
                  %546 = vst [vmem:[%s468 + $0x80] sm:$0xff] %v545
                  %v547 = vld [vmem:[%s467 + $0x90] sm:$0xff]
                  %548 = vst [vmem:[%s468 + $0x88] sm:$0xff] %v547
                  %v549 = vld [vmem:[%s467 + $0x98] sm:$0xff]
                  %550 = vst [vmem:[%s468 + $0x90] sm:$0xff] %v549
                  %v551 = vld [vmem:[%s467 + $0xa0] sm:$0xff]
                  %552 = vst [vmem:[%s468 + $0x98] sm:$0xff] %v551
                  %v553 = vld [vmem:[%s467 + $0xa8] sm:$0xff]
                  %554 = vst [vmem:[%s468 + $0xa0] sm:$0xff] %v553
                  %v555 = vld [vmem:[%s467 + $0xb0] sm:$0xff]
                  %556 = vst [vmem:[%s468 + $0xa8] sm:$0xff] %v555
                  %v557 = vld [vmem:[%s467 + $0xb8] sm:$0xff]
                  %558 = vst [vmem:[%s468 + $0xb0] sm:$0xff] %v557
                  %v559 = vld [vmem:[%s467 + $0xc0] sm:$0xff]
                  %560 = vst [vmem:[%s468 + $0xb8] sm:$0xff] %v559
                  %v561 = vld [vmem:[%s467 + $0xc8] sm:$0xff]
                  %562 = vst [vmem:[%s468 + $0xc0] sm:$0xff] %v561
                  %v563 = vld [vmem:[%s467 + $0xd0] sm:$0xff]
                  %564 = vst [vmem:[%s468 + $0xc8] sm:$0xff] %v563
                  %v565 = vld [vmem:[%s467 + $0x30] sm:$0xff]
                  %566 = vst [vmem:[%s468 + $0x20] sm:$0xff] %v565
                  %v567 = vld [vmem:[%s467 + $0x38] sm:$0xff]
                  %568 = vst [vmem:[%s468 + $0x28] sm:$0xff] %v567
                  %v569 = vld [vmem:[%s467 + $0x40] sm:$0xff]
                  %570 = vst [vmem:[%s468 + $0x30] sm:$0xff] %v569
                  %v571 = vld [vmem:[%s467 + $0x48] sm:$0xff]
                  %572 = vst [vmem:[%s468 + $0x38] sm:$0xff] %v571
                  %v573 = vld [vmem:[%s467 + $0x50] sm:$0xff]
                  %574 = vst [vmem:[%s468 + $0x40] sm:$0xff] %v573
                  %v575 = vld [vmem:[%s467 + $0x58] sm:$0xff]
                  %576 = vst [vmem:[%s468 + $0x48] sm:$0xff] %v575
                  %v577 = vld [vmem:[%s467 + $0x60] sm:$0xff]
                  %578 = vst [vmem:[%s468 + $0x50] sm:$0xff] %v577
                  %v579 = vld [vmem:[%s467 + $0x68] sm:$0xff]
                  %580 = vst [vmem:[%s468 + $0x58] sm:$0xff] %v579
                  %v581 = vld [vmem:[%s467 + $0x70] sm:$0xff]
                  %582 = vst [vmem:[%s468 + $0x60] sm:$0xff] %v581
                  %v583 = vld [vmem:[%s467 + $0x78] sm:$0xff]
                  %584 = vst [vmem:[%s468 + $0x68] sm:$0xff] %v583
                  %v585 = vld [vmem:[%s467 + $0x80] sm:$0xff]
                  %586 = vst [vmem:[%s468 + $0x70] sm:$0xff] %v585
                  %v587 = vld [vmem:[%s467 + $0x88] sm:$0xff]
                  %588 = vst [vmem:[%s468 + $0x78] sm:$0xff] %v587
                  %v589 = vld [vmem:[%s467 + $0x90] sm:$0xff]
                  %590 = vst [vmem:[%s468 + $0x80] sm:$0xff] %v589
                  %v591 = vld [vmem:[%s467 + $0x98] sm:$0xff]
                  %592 = vst [vmem:[%s468 + $0x88] sm:$0xff] %v591
                  %v593 = vld [vmem:[%s467 + $0xa0] sm:$0xff]
                  %594 = vst [vmem:[%s468 + $0x90] sm:$0xff] %v593
                  %v595 = vld [vmem:[%s467 + $0xa8] sm:$0xff]
                  %596 = vst [vmem:[%s468 + $0x98] sm:$0xff] %v595
                  %v597 = vld [vmem:[%s467 + $0xb0] sm:$0xff]
                  %598 = vst [vmem:[%s468 + $0xa0] sm:$0xff] %v597
                  %v599 = vld [vmem:[%s467 + $0xb8] sm:$0xff]
                  %600 = vst [vmem:[%s468 + $0xa8] sm:$0xff] %v599
                  %v601 = vld [vmem:[%s467 + $0xc0] sm:$0xff]
                  %602 = vst [vmem:[%s468 + $0xb0] sm:$0xff] %v601
                  %v603 = vld [vmem:[%s467 + $0xc8] sm:$0xff]
                  %604 = vst [vmem:[%s468 + $0xb8] sm:$0xff] %v603
                  %v605 = vld [vmem:[%s467 + $0xd0] sm:$0xff]
                  %606 = vst [vmem:[%s468 + $0xc0] sm:$0xff] %v605
                  %v607 = vld [vmem:[%s467 + $0xd8] sm:$0xff]
                  %608 = vst [vmem:[%s468 + $0xc8] sm:$0xff] %v607
                  %v609 = vld [vmem:[%s467 + $0xe0] sm:$0xff]
                  %610 = vst [vmem:[%s468 + $0xd0] sm:$0xff] %v609
                  %v611 = vld [vmem:[%s467 + $0xe8] sm:$0xff]
                  %612 = vst [vmem:[%s468 + $0xd8] sm:$0xff] %v611
                  %s613 = sadd.s32 1, %s466
                  %p614 = scmp.ge.s32.totalorder %s613, %s456
                  %s615 = scalar_select %p614, 0, %s613
                  %s616 = smul.u32 %s615, 192
                  %s617 = smul.u32 %s615, 192
                  %s618 = scalar_lea.vmem %s217, %s616
                  %s619 = scalar_lea.vmem %s205, %s617 [#allocation2]
                $region70: #{tpu_custom_call.1} parent=64 // loop_footer
                  %s463 = sadd.s32 %s461, 1
                $region71: #{tpu_custom_call.1} parent=64 // loop_footer_branch
                  %460 = sbr.rel target = $region67
                $region72: #{tpu_custom_call.1} parent=64 // loop_exit
                  _
                %s620 = sdiv.u32.pop %s455, 24
                %s621 = srem.u32.pop %s455, 24
                %s622 = smul.u32 %s620, 24
                %s623 = smul.u32 128, %s622
                %s624 = sshra.s32 %s623, 4
                %s625 = scalar_lea.vmem %s217, %s624
                %s626 = smul.u32 128, %s622
                %s627 = sshra.s32 %s626, 4
                %s628 = scalar_lea.vmem %s205, %s627 [#allocation2]
                // While loop
                $region73: #{tpu_custom_call.1} parent=64 // loop_pre_header
                  _
                $region74: #{tpu_custom_call.1} parent=64 // loop_header
                  %s632 = sphi 0, %s634
                  %p633 = scmp.ge.s32.totalorder %s632, %s621
                  %s637 = sphi 0, %s648
                  %s638 = sphi %s625, %s651
                  %s639 = sphi %s628, %s652
                $region75: #{tpu_custom_call.1} parent=64 // loop_header_branch
                  %636 = sbr.rel (%p633) target = $region79
                $region76: #{tpu_custom_call.1} parent=64 // loop_body
                  %v640 = vld [vmem:[%s638] sm:$0xff]
                  %641 = vst [vmem:[%s639] sm:$0xff] %v640
                  %v642 = vld [vmem:[%s638 + $0x18] sm:$0xff]
                  %643 = vst [vmem:[%s639 + $0x10] sm:$0xff] %v642
                  %v644 = vld [vmem:[%s638 + $0x30] sm:$0xff]
                  %645 = vst [vmem:[%s639 + $0x20] sm:$0xff] %v644
                  %s646 = sadd.s32 1, %s637
                  %p647 = scmp.ge.s32.totalorder %s646, %s621
                  %s648 = scalar_select %p647, 0, %s646
                  %s649 = smul.u32 %s648, 8
                  %s650 = smul.u32 %s648, 8
                  %s651 = scalar_lea.vmem %s625, %s649
                  %s652 = scalar_lea.vmem %s628, %s650 [#allocation2]
                $region77: #{tpu_custom_call.1} parent=64 // loop_footer
                  %s634 = sadd.s32 %s632, 1
                $region78: #{tpu_custom_call.1} parent=64 // loop_footer_branch
                  %631 = sbr.rel target = $region74
                $region79: #{tpu_custom_call.1} parent=64 // loop_exit
                  _
                %s653 = sshllo.u32 0, %s450
                loop: start=0, step=1, limit=1
                $region80: #{tpu_custom_call.1} parent=64 // loop_pre_header
                  _
                $region81: #{tpu_custom_call.1} parent=64 // loop_header
                  %s655 = sphi 0, %s659
                  %p656 = scmp.ge.s32.totalorder %s655, 1
                  %s660 = sphi %s452, %s452
                  %s661 = sphi %s454, %s454
                $region82: #{tpu_custom_call.1} parent=64 // loop_header_branch
                  %658 = sbr.rel (%p656) target = $region86
                $region83: #{tpu_custom_call.1} parent=64 // loop_body
                  %v662 = vld [vmem:[%s660] sm:%s653]
                  %663 = vst [vmem:[%s661] sm:%s653] %v662
                  %v664 = vld [vmem:[%s660 + $0x18] sm:%s653]
                  %665 = vst [vmem:[%s661 + $0x10] sm:%s653] %v664
                  %v666 = vld [vmem:[%s660 + $0x30] sm:%s653]
                  %667 = vst [vmem:[%s661 + $0x20] sm:%s653] %v666
                $region84: #{tpu_custom_call.1} parent=64 // loop_footer
                  %s659 = sadd.s32 1, %s655
                $region85: #{tpu_custom_call.1} parent=64 // loop_footer_branch
                  %654 = sbr.rel target = $region81
                $region86: #{tpu_custom_call.1} parent=64 // loop_exit
                  _
              $region65: #{tpu_custom_call.1} parent=31 // pred_fallthru
                _
            $region32: #{tpu_custom_call.1} parent=27 // pred_fallthru
              _
            // Predicated region
            $region33: #{tpu_custom_call.1} parent=27 // pred_check
              %p226 = pneg %p222
            $region34: #{tpu_custom_call.1} parent=27 // pred_check_branch
              %228 = sbr.rel (%p226) target = $region36
            $region35: #{tpu_custom_call.1} parent=27 // pred_region
              %s229 = sshllo.u32 0, %s218
              loop: start=0, step=1, limit=1
              $region37: #{tpu_custom_call.1} parent=35 // loop_pre_header
                _
              $region38: #{tpu_custom_call.1} parent=35 // loop_header
                %s231 = sphi 0, %s235
                %p232 = scmp.ge.s32.totalorder %s231, 1
                %s236 = sphi %s217, %s217
                %s237 = sphi %s205, %s205
              $region39: #{tpu_custom_call.1} parent=35 // loop_header_branch
                %234 = sbr.rel (%p232) target = $region43
              $region40: #{tpu_custom_call.1} parent=35 // loop_body
                %v238 = vld [vmem:[%s236] sm:%s229]
                %239 = vst [vmem:[%s237] sm:%s229] %v238
                %v240 = vld [vmem:[%s236 + $0x18] sm:%s229]
                %241 = vst [vmem:[%s237 + $0x10] sm:%s229] %v240
                %v242 = vld [vmem:[%s236 + $0x30] sm:%s229]
                %243 = vst [vmem:[%s237 + $0x20] sm:%s229] %v242
              $region41: #{tpu_custom_call.1} parent=35 // loop_footer
                %s235 = sadd.s32 1, %s231
              $region42: #{tpu_custom_call.1} parent=35 // loop_footer_branch
                %230 = sbr.rel target = $region38
              $region43: #{tpu_custom_call.1} parent=35 // loop_exit
                _
            $region36: #{tpu_custom_call.1} parent=27 // pred_fallthru
              _
          $region28: #{tpu_custom_call.1} parent=23 // pred_fallthru
            _
          %668 = vnop
        $region24: #{tpu_custom_call.1} parent=19 // pred_fallthru
          _
        // Predicated region
        $region87: #{tpu_custom_call.1} parent=19 // pred_check
          %p669 = pneg %p94
        $region88: #{tpu_custom_call.1} parent=19 // pred_check_branch
          %671 = sbr.rel (%p669) target = $region90
        $region89: #{tpu_custom_call.1} parent=19 // pred_region
          %s672 = smul.u32 %s25, 2
          %s673 = sadd.s32 %s672, %s26
          %s674 = smul.u32 2, %s673
          %s675 = ssub.s32 3, %s674
          %p676 = scmp.lt.s32.totalorder %s675, 2
          %s677 = scalar_select %p676, %s675, 2
          %s678 = smul.u32 16, %s677
          %p679 = scmp.lt.s32.totalorder %s24, 1
          %s680 = scalar_select %p679, %s24, 1
          %p681 = scmp.lt.s32.totalorder %s674, 2
          %s682 = scalar_select %p681, %s674, 2
          %s683 = smul.addr %s680, 3
          %s684 = sadd.s32 %s682, %s683
          %s685 = scalar_lea.vmem %s1, %s684
          %s686 = smul.u32 %s25, 2
          %s687 = sadd.s32 %s686, %s26
          %s688 = smul.u32 2, %s687
          %s689 = ssub.s32 3, %s688
          %p690 = scmp.lt.s32.totalorder %s689, 2
          %s691 = scalar_select %p690, %s689, 2
          %s692 = smul.u32 16, %s691
        $region90: #{tpu_custom_call.1} parent=19 // pred_fallthru
          _
      $region20: #{tpu_custom_call.1} parent=5 // pred_fallthru
        _
      %p693 = scmp.le.s32.totalorder 1, %s17
      %p694 = scmp.lt.s32.totalorder %s17, 5
      %p695 = pnand %p693, %p694
      %p696 = pneg %p695
      // Predicated region
      $region91: #{tpu_custom_call.1} parent=5 // pred_check
        _
      $region92: #{tpu_custom_call.1} parent=5 // pred_check_branch
        %698 = sbr.rel (%p695) target = $region94
      $region93: #{tpu_custom_call.1} parent=5 // pred_region
        %s699 = ssub.s32 %s17, 1
        %s700 = sand.u32 %s55, 1
        %s701 = sand.u32 %s55, 1
        %s702 = smul.addr %s701, 48
        %s703 = scalar_lea.vmem [#allocation2], %s702
        // Predicated region
        $region95: #{tpu_custom_call.1} parent=93 // pred_check
          %p704 = pneg %p68
        $region96: #{tpu_custom_call.1} parent=93 // pred_check_branch
          %706 = sbr.rel (%p704) target = $region98
        $region97: #{tpu_custom_call.1} parent=93 // pred_region
          _
        $region98: #{tpu_custom_call.1} parent=93 // pred_fallthru
          _
        %s707 = sand.u32 %s55, 1
        %s708 = sand.u32 %s55, 1
        %s709 = smul.addr %s708, 48
        %s710 = scalar_lea.vmem [#allocation2], %s709
        %p711 = pneg %p68
        %p712 = pneg %p65
        %s713 = smul.u32 %s28, 2
        %s714 = sadd.s32 %s713, %s29
        %s715 = smul.u32 2, %s714
        %s716 = ssub.s32 3, %s715
        %p717 = scmp.lt.s32.totalorder %s716, 2
        %s718 = scalar_select %p717, %s716, 2
        %s719 = smul.u32 16, %s718
        %p720 = scmp.lt.s32.totalorder %s27, 1
        %s721 = scalar_select %p720, %s27, 1
        %p722 = scmp.lt.s32.totalorder %s715, 2
        %s723 = scalar_select %p722, %s715, 2
        %s724 = smul.addr %s721, 3
        %s725 = sadd.s32 %s723, %s724
        %s726 = scalar_lea.vmem %s1, %s725
        %p727 = pneg %p100
        %p728 = pneg %p97
        %p729 = pneg %p121
        %p730 = pneg %p118
        %p731 = pneg %p149
        %p732 = pneg %p146
        %s733 = sand.u32 %s136, 1
        %s734 = scalar_lea.sflag [#allocation4], %s733
        %s735 = sand.u32 %s136, 1
        %s736 = smul.addr %s735, 2
        %s737 = scalar_lea.vmem [#allocation3], %s736
        %p738 = pneg %p177
        %p739 = pneg %p174
        %s740 = sand.u32 %s164, 1
        %s741 = scalar_lea.sflag [#allocation6], %s740
        %s742 = sand.u32 %s164, 1
        %s743 = smul.addr %s742, 2
        %s744 = scalar_lea.vmem [#allocation5], %s743
        %s745 = smul.u32 %s28, 2
        %s746 = sadd.s32 %s745, %s29
        %s747 = smul.u32 2, %s746
        %s748 = ssub.s32 3, %s747
        %p749 = scmp.lt.s32.totalorder %s748, 2
        %s750 = scalar_select %p749, %s748, 2
        %s751 = smul.u32 384, %s750
        %s752 = smul.u32 %s28, 2
        %s753 = sadd.s32 %s752, %s29
        %s754 = smul.u32 2, %s753
        %s755 = ssub.s32 3, %s754
        %p756 = scmp.lt.s32.totalorder %s755, 2
        %s757 = scalar_select %p756, %s755, 2
        %s758 = smul.u32 16, %s757
        %p759 = scmp.lt.s32.totalorder %s27, 1
        %s760 = scalar_select %p759, %s27, 1
        %p761 = scmp.lt.s32.totalorder %s754, 2
        %s762 = scalar_select %p761, %s754, 2
        %s763 = smul.addr %s760, 3
        %s764 = sadd.s32 %s762, %s763
        %s765 = scalar_lea.vmem %s1, %s764
        %s766 = smul.u32 %s28, 2
        %s767 = sadd.s32 %s766, %s29
        %s768 = smul.u32 2, %s767
        %s769 = ssub.s32 3, %s768
        %p770 = scmp.lt.s32.totalorder %s769, 2
        %s771 = scalar_select %p770, %s769, 2
        %s772 = smul.u32 16, %s771
        %s773 = sadd.s32 %s27, %s28
        %s774 = sadd.s32 %s27, %s28
        %p775 = scmp.eq.s32.totalorder %s29, 0
        // Predicated region
        $region99: #{tpu_custom_call.1} parent=93 // pred_check
          %p776 = pneg %p775
        $region100: #{tpu_custom_call.1} parent=93 // pred_check_branch
          %778 = sbr.rel (%p776) target = $region102
        $region101: #{tpu_custom_call.1} parent=93 // pred_region
          %v779 = vlaneseq
          %vm780 = vcmp.ge.s32.totalorder %v779, 0
          %vm781 = vcmp.lt.s32.totalorder %v779, 256
          %vm782 = vmand %vm780, %vm781
          %783 = vst.msk [vmem:[%s737] sm:$0x3] %vm782, 0.0
          %784 = vst.msk [vmem:[%s744] sm:$0x3] %vm782, 0.0
        $region102: #{tpu_custom_call.1} parent=93 // pred_fallthru
          _
        %v785 = vld [vmem:[%s703] sm:$0xff]
        %v786 = vld [vmem:[%s703 + $0x8] sm:$0xff]
        %v787 = vld [vmem:[%s703 + $0x10] sm:$0xff]
        %v788 = vld [vmem:[%s703 + $0x18] sm:$0xff]
        %v789 = vld [vmem:[%s703 + $0x20] sm:$0x7]
        %v790 = vld [vmem:[%s703 + $0x28] sm:$0x7]
        %v791 = vld [vmem:[%s765] sm:$0x3]
        %v792 = vld [vmem:[%s2] sm:$0xff]
        %v793 = vld [vmem:[%s2 + $0x8] sm:$0xff]
        %v794 = vld [vmem:[%s2 + $0x10] sm:$0x7]
        %vm795 = vcmask 1042432
        %v796 = vsel %vm795, %v789, -inf
        %v797 = vmax.f32 %v785, %v796
        %v798 = vmax.f32 %v797, %v787
        %v799 = vrot.slane %v798, 4
        %v800 = vmax.f32 %v798, %v799
        %v801 = vrot.slane %v800, 2
        %v802 = vmax.f32 %v800, %v801
        %v803 = vrot.slane %v802, 1
        %v804 = vmax.f32 %v802, %v803
        %v805 = vsel %vm795, %v790, -inf
        %v806 = vmax.f32 %v786, %v805
        %v807 = vmax.f32 %v806, %v788
        %v808 = vrot.slane %v807, 4
        %v809 = vmax.f32 %v807, %v808
        %v810 = vrot.slane %v809, 2
        %v811 = vmax.f32 %v809, %v810
        %v812 = vrot.slane %v811, 1
        %v813 = vmax.f32 %v811, %v812
        %v814 = vsub.f32 %v785, %v804
        %v815 = vsub.f32 %v786, %v813
        %v816 = vsub.f32 %v787, %v804
        %v817 = vsub.f32 %v788, %v813
        %v818 = vsub.f32 %v789, %v804
        %v819 = vsub.f32 %v790, %v813
        %v820 = vmul.f32 %v814, 1.442695
        %v821 = vpow.pop %v820
        %v822 = vmul.f32 %v815, 1.442695
        %v823 = vpow.pop %v822
        %v824 = vmul.f32 %v816, 1.442695
        %v825 = vpow.pop %v824
        %v826 = vmul.f32 %v817, 1.442695
        %v827 = vpow.pop %v826
        %v828 = vmul.f32 %v818, 1.442695
        %v829 = vpow.pop %v828
        %v830 = vmul.f32 %v819, 1.442695
        %v831 = vpow.pop %v830
        %v832 = vadd.f32 %v821, %v825
        %v833 = vsel %vm795, %v829, 0.0
        %v834 = vadd.f32 %v832, %v833
        %v835 = vrot.slane %v834, 4
        %v836 = vadd.f32 %v834, %v835
        %v837 = vrot.slane %v836, 2
        %v838 = vadd.f32 %v836, %v837
        %v839 = vrot.slane %v838, 1
        %v840 = vadd.f32 %v838, %v839
        %v841 = vadd.f32 %v823, %v827
        %v842 = vsel %vm795, %v831, 0.0
        %v843 = vadd.f32 %v841, %v842
        %v844 = vrot.slane %v843, 4
        %v845 = vadd.f32 %v843, %v844
        %v846 = vrot.slane %v845, 2
        %v847 = vadd.f32 %v845, %v846
        %v848 = vrot.slane %v847, 1
        %v849 = vadd.f32 %v847, %v848
        %v850 = vlog2.pop %v840
        %v851 = vmul.f32 %v850, 0.6931472
        %v852 = vlog2.pop %v849
        %v853 = vmul.f32 %v852, 0.6931472
        %v854 = vlaneseq
        %v855 = vshrl.u32 %v854, 7
        %v856 = vadd.s32 %v855, 8
        %v857 = vadd.s32 %v855, 16
        %v858 = vlaneseq
        %v859 = vshrl.u32 %v858, 7
        %v860 = vsub.s32 0, %v859
        %v861 = vrot.slane %v791, %v860
        %v862 = vlaneseq
        %v863 = vshrl.u32 %v862, 7
        %v864 = vsub.s32 1, %v863
        %v865 = vrot.slane %v791, %v864
        %vm866 = vcmp.eq.s32.totalorder %v855, %v861
        %vm867 = vcmp.eq.s32.totalorder %v855, %v865
        %vm868 = vcmp.eq.s32.totalorder %v856, %v861
        %vm869 = vcmp.eq.s32.totalorder %v856, %v865
        %vm870 = vcmp.eq.s32.totalorder %v857, %v861
        %vm871 = vcmp.eq.s32.totalorder %v857, %v865
        %v872 = vsel %vm866, %v785, 0.0
        %v873 = vsel %vm867, %v786, 0.0
        %v874 = vsel %vm868, %v787, 0.0
        %v875 = vsel %vm869, %v788, 0.0
        %v876 = vsel %vm870, %v789, 0.0
        %v877 = vsel %vm871, %v790, 0.0
        %v878 = vadd.f32 %v872, %v874
        %v879 = vsel %vm795, %v876, 0.0
        %v880 = vadd.f32 %v878, %v879
        %v881 = vrot.slane %v880, 4
        %v882 = vadd.f32 %v880, %v881
        %v883 = vrot.slane %v882, 2
        %v884 = vadd.f32 %v882, %v883
        %v885 = vrot.slane %v884, 1
        %v886 = vadd.f32 %v884, %v885
        %v887 = vadd.f32 %v873, %v875
        %v888 = vsel %vm795, %v877, 0.0
        %v889 = vadd.f32 %v887, %v888
        %v890 = vrot.slane %v889, 4
        %v891 = vadd.f32 %v889, %v890
        %v892 = vrot.slane %v891, 2
        %v893 = vadd.f32 %v891, %v892
        %v894 = vrot.slane %v893, 1
        %v895 = vadd.f32 %v893, %v894
        %897 = vset.pattern.permute.xlu0 0
        %898 = vperm.xlu0 %897, %v792
        %v899 = vpop.permute.xlu0 %898
        %902 = vset.pattern.permute.xlu0 0
        %903 = vperm.xlu0 %902, %v793
        %v904 = vpop.permute.xlu0 %903
        %907 = vset.pattern.permute.xlu0 0
        %908 = vperm.xlu0 %907, %v794
        %v909 = vpop.permute.xlu0 %908
        %v911 = vsel %vm866, %v899, 0.0
        %v912 = vsel %vm867, %v899, 0.0
        %v913 = vsel %vm868, %v904, 0.0
        %v914 = vsel %vm869, %v904, 0.0
        %v915 = vsel %vm870, %v909, 0.0
        %v916 = vsel %vm871, %v909, 0.0
        %v917 = vadd.f32 %v911, %v913
        %v918 = vsel %vm795, %v915, 0.0
        %v919 = vadd.f32 %v917, %v918
        %v920 = vrot.slane %v919, 4
        %v921 = vadd.f32 %v919, %v920
        %v922 = vrot.slane %v921, 2
        %v923 = vadd.f32 %v921, %v922
        %v924 = vrot.slane %v923, 1
        %v925 = vadd.f32 %v923, %v924
        %v926 = vadd.f32 %v912, %v914
        %v927 = vsel %vm795, %v916, 0.0
        %v928 = vadd.f32 %v926, %v927
        %v929 = vrot.slane %v928, 4
        %v930 = vadd.f32 %v928, %v929
        %v931 = vrot.slane %v930, 2
        %v932 = vadd.f32 %v930, %v931
        %v933 = vrot.slane %v932, 1
        %v934 = vadd.f32 %v932, %v933
        %v935 = vadd.f32 %v804, %v851
        %v936 = vadd.f32 %v813, %v853
        %v937 = vsub.f32 %v935, %v886
        %v938 = vsub.f32 %v936, %v895
        %vm939 = vcmp.ne.s32.totalorder %v791, 255
        %vm940 = vcmp.ge.f32.partialorder %v937, 0.51082563
        %vm941 = vcmp.ge.f32.partialorder %v938, 0.51082563
        %v942 = vsel %vm940, 1, 0
        %v943 = vsel %vm941, 1, 0
        %v944 = vcombine.low %v942, %v943
        %v946 = vunpack.c.l.s4 1966171168
        %v947 = vunpack.c.0.s8 %v946
        %v948 = vlaneseq
        %v949 = vshrl.u32 %v948, 7
        %v950 = vsub.s32 %v947, %v949
        %v951 = vrot.slane %v944, %v950
        %v953 = vunpack.c.l.s4 1966171168
        %v954 = vunpack.c.0.s8 %v953
        %v955 = vlaneseq
        %v956 = vshrl.u32 %v955, 7
        %v957 = vsub.s32 %v954, %v956
        %v958 = vrot.slane %v951, %v957
        %vm959 = vcmp.ne.s32.totalorder %v958, 0
        %vm960 = vmand %vm939, %vm959
        %v961 = vlaneseq
        %v962 = vand.u32 %v961, 127
        %v963 = vadd.s32 %v962, 128
        %s964 = smul.u32 %s28, 2
        %s965 = sadd.s32 %s964, %s29
        %s966 = smul.u32 %s965, 256
        %v967 = vstv %s966
        %v968 = vadd.s32 %v967, %v962
        %v969 = vadd.s32 %v967, %v963
        %vm970 = vcmp.lt.s32.totalorder %v968, 320
        %vm971 = vcmp.lt.s32.totalorder %v969, 320
        %v972 = vsel %vm970, 1, 0
        %v973 = vsel %vm971, 1, 0
        %v974 = vcombine.low %v972, %v973
        %v976 = vunpack.c.l.s4 1966171168
        %v977 = vunpack.c.0.s8 %v976
        %v978 = vlaneseq
        %v979 = vshrl.u32 %v978, 7
        %v980 = vsub.s32 %v977, %v979
        %v981 = vrot.slane %v974, %v980
        %v983 = vunpack.c.l.s4 1966171168
        %v984 = vunpack.c.0.s8 %v983
        %v985 = vlaneseq
        %v986 = vshrl.u32 %v985, 7
        %v987 = vsub.s32 %v984, %v986
        %v988 = vrot.slane %v981, %v987
        %vm989 = vcmp.ne.s32.totalorder %v988, 0
        %vm990 = vmand %vm960, %vm989
        %v991 = vld [vmem:[%s737] sm:$0x3]
        %v992 = vmul.f32 %v925, %v937
        %v993 = vmul.f32 %v934, %v938
        %v996 = vcombine.low %v992, %v993
        %v998 = vunpack.c.l.s4 1966171168
        %v999 = vunpack.c.0.s8 %v998
        %v1000 = vlaneseq
        %v1001 = vshrl.u32 %v1000, 7
        %v1002 = vsub.s32 %v999, %v1001
        %v1003 = vrot.slane %v996, %v1002
        %v1005 = vunpack.c.l.s4 1966171168
        %v1006 = vunpack.c.0.s8 %v1005
        %v1007 = vlaneseq
        %v1008 = vshrl.u32 %v1007, 7
        %v1009 = vsub.s32 %v1006, %v1008
        %v1010 = vrot.slane %v1003, %v1009
        %v1012 = vsel %vm990, %v1010, 0.0
        %v1013 = vadd.f32 %v991, %v1012
        %v1014 = vlaneseq
        %vm1015 = vcmp.ge.s32.totalorder %v1014, 0
        %vm1016 = vcmp.lt.s32.totalorder %v1014, 256
        %vm1017 = vmand %vm1015, %vm1016
        %1018 = vst.msk [vmem:[%s737] sm:$0x3] %vm1017, %v1013
        %v1019 = vld [vmem:[%s744] sm:$0x3]
        %v1022 = vcombine.low %v925, %v934
        %v1024 = vunpack.c.l.s4 1966171168
        %v1025 = vunpack.c.0.s8 %v1024
        %v1026 = vlaneseq
        %v1027 = vshrl.u32 %v1026, 7
        %v1028 = vsub.s32 %v1025, %v1027
        %v1029 = vrot.slane %v1022, %v1028
        %v1031 = vunpack.c.l.s4 1966171168
        %v1032 = vunpack.c.0.s8 %v1031
        %v1033 = vlaneseq
        %v1034 = vshrl.u32 %v1033, 7
        %v1035 = vsub.s32 %v1032, %v1034
        %v1036 = vrot.slane %v1029, %v1035
        %v1038 = vsel %vm990, %v1036, 0.0
        %v1039 = vadd.f32 %v1019, %v1038
        %1040 = vst.msk [vmem:[%s744] sm:$0x3] %vm1017, %v1039
        %s1041 = sand.u32 %s136, 1
        %s1042 = scalar_lea.sflag [#allocation4], %s1041
        %s1043 = sand.u32 %s136, 1
        %s1044 = smul.addr %s1043, 2
        %s1045 = scalar_lea.vmem [#allocation3], %s1044
        %s1046 = sand.u32 %s164, 1
        %s1047 = scalar_lea.sflag [#allocation6], %s1046
        %s1048 = sand.u32 %s164, 1
        %s1049 = smul.addr %s1048, 2
        %s1050 = scalar_lea.vmem [#allocation5], %s1049
        // Predicated region
        $region103: #{tpu_custom_call.1} parent=93 // pred_check
          %p1051 = pneg %p146
        $region104: #{tpu_custom_call.1} parent=93 // pred_check_branch
          %1053 = sbr.rel (%p1051) target = $region106
        $region105: #{tpu_custom_call.1} parent=93 // pred_region
          %s1054 = sadd.s32 %s27, %s28
          %s1056 = ssub.s32 32, 32
          %1057 = vsyncadd %s1042, %s1056
          %s1058 = smul.addr %s1054, 2
          %s1059 = smul.addr %s1058, 16
          %s1060 = scalar_lea.hbm %s3, %s1059
          %s1062 = sshll.u32 %s1045, 4
          %s1063 = int_to_ptr.vmem [resolvable:$true] %s1062
          %1065 = dma.vmem_to_hbm [thread:$0]  %s1063, 32, %s1060, %s1042
        $region106: #{tpu_custom_call.1} parent=93 // pred_fallthru
          _
        // Predicated region
        $region107: #{tpu_custom_call.1} parent=93 // pred_check
          %p1066 = pneg %p174
        $region108: #{tpu_custom_call.1} parent=93 // pred_check_branch
          %1068 = sbr.rel (%p1066) target = $region110
        $region109: #{tpu_custom_call.1} parent=93 // pred_region
          %s1069 = sadd.s32 %s27, %s28
          %s1071 = ssub.s32 32, 32
          %1072 = vsyncadd %s1047, %s1071
          %s1073 = smul.addr %s1069, 2
          %s1074 = smul.addr %s1073, 16
          %s1075 = scalar_lea.hbm %s4, %s1074
          %s1077 = sshll.u32 %s1050, 4
          %s1078 = int_to_ptr.vmem [resolvable:$true] %s1077
          %1080 = dma.vmem_to_hbm [thread:$0]  %s1078, 32, %s1075, %s1047
        $region110: #{tpu_custom_call.1} parent=93 // pred_fallthru
          _
      $region94: #{tpu_custom_call.1} parent=5 // pred_fallthru
        _
      %p1081 = scmp.le.s32.totalorder 2, %s17
      // Predicated region
      $region111: #{tpu_custom_call.1} parent=5 // pred_check
        %p1082 = pneg %p1081
      $region112: #{tpu_custom_call.1} parent=5 // pred_check_branch
        %1084 = sbr.rel (%p1082) target = $region114
      $region113: #{tpu_custom_call.1} parent=5 // pred_region
        %s1085 = ssub.s32 %s17, 2
        // Predicated region
        $region115: #{tpu_custom_call.1} parent=113 // pred_check
          %p1086 = pneg %p152
        $region116: #{tpu_custom_call.1} parent=113 // pred_check_branch
          %1088 = sbr.rel (%p1086) target = $region118
        $region117: #{tpu_custom_call.1} parent=113 // pred_region
          %s1089 = sand.u32 %s137, 1
          %s1090 = scalar_lea.sflag [#allocation4], %s1089
          %s1091 = sand.u32 %s137, 1
          %s1092 = smul.addr %s1091, 2
          %s1093 = scalar_lea.vmem [#allocation3], %s1092
          %1094 = dma.done %s1090, 32
        $region118: #{tpu_custom_call.1} parent=113 // pred_fallthru
          _
        // Predicated region
        $region119: #{tpu_custom_call.1} parent=113 // pred_check
          %p1095 = pneg %p180
        $region120: #{tpu_custom_call.1} parent=113 // pred_check_branch
          %1097 = sbr.rel (%p1095) target = $region122
        $region121: #{tpu_custom_call.1} parent=113 // pred_region
          %s1098 = sand.u32 %s165, 1
          %s1099 = scalar_lea.sflag [#allocation6], %s1098
          %s1100 = sand.u32 %s165, 1
          %s1101 = smul.addr %s1100, 2
          %s1102 = scalar_lea.vmem [#allocation5], %s1101
          %1103 = dma.done %s1099, 32
        $region122: #{tpu_custom_call.1} parent=113 // pred_fallthru
          _
      $region114: #{tpu_custom_call.1} parent=5 // pred_fallthru
        _
    $region6: #{tpu_custom_call.1} parent=1 // loop_footer
      %s21 = sadd.s32 1, %s17
    $region7: #{tpu_custom_call.1} parent=1 // loop_footer_branch
      %16 = sbr.rel target = $region3
    $region8: #{tpu_custom_call.1} parent=1 // loop_exit
      _
    %1104 = vsyncpa [#allocation4], 1
    %s1105 = scalar_lea.sflag [#allocation4], 1
    %1106 = vsyncpa %s1105, 1
    %1107 = vsyncpa [#allocation6], 1
    %s1108 = scalar_lea.sflag [#allocation6], 1
    %1109 = vsyncpa %s1108, 1

</llo_original>
